<compile_context>
chip_gen: v5e
topology: v5e:2x2
jax: 0.10.0
libtpu: 0.0.40
codegen_flags: <defaults>
</compile_context>

<pallas_src>
import jax
import jax.numpy as jnp
from jax import lax
from jax.experimental import pallas as pl
from jax.experimental.pallas import tpu as pltpu


# ---------------------------------------------------------------------------
# Fused kernel: conv1 -> relu -> conv2 -> relu -> conv3 -> relu -> pool -> fc1
# ---------------------------------------------------------------------------
def _make_fused_gat_kernel(use_bf16_softmax: bool):
    exp_dtype = jnp.bfloat16 if use_bf16_softmax else jnp.float32

    def kernel(
        x_ref, adj_ref, batch_ref,
        w1_ref, as1_ref, ad1_ref, b1_ref,
        w2_ref, as2_ref, ad2_ref, b2_ref,
        w3_ref, as3_ref, ad3_ref, b3_ref,
        wfc_ref, bfc_ref,
        o_ref,
    ):
        n = adj_ref.shape[0]
        num_graphs = o_ref.shape[0]

        # Neighborhood predicate from the resident int8 adjacency (no persistent
        # f32 additive-bias array).  adj[i, j] = 1 iff edge j -> i or i == j.
        neighbor = adj_ref[...] != 0                                    # [N, N]

        def gat_layer(h, w_ref, asrc_ref, adst_ref, bias_ref):
            w = w_ref[...]                                              # [Fin, Fout]
            f_in = w.shape[0]
            if f_in <= 8:
                # Tiny contraction depth (conv1: Fin = 4): a handful of VPU
                # broadcast-multiply-adds instead of a degenerate K=4 MXU push.
                hw = h[:, 0:1] * w[0:1, :]
                for k in range(1, f_in):
                    hw = hw + h[:, k:k + 1] * w[k:k + 1, :]
            else:
                hw = jnp.dot(h.astype(jnp.bfloat16), w.astype(jnp.bfloat16),
                             preferred_element_type=jnp.float32)        # [N, Fout]

            # Per-node attention scalars.
            # a_dst: VPU multiply + XLU lane-reduce (otherwise-idle slots).
            a_dst = jnp.sum(hw * adst_ref[...], axis=-1, keepdims=True)  # [N, 1]
            # a_src: feature-dim contraction producing a [1, N] row directly.
            a_src = lax.dot_general(asrc_ref[...], hw, (((1,), (1,)), ((), ())),
                                    preferred_element_type=jnp.float32)  # [1, N]

            # e[i, j] = leaky_relu(a_dst[i] + a_src[j], 0.2), masked to neighborhood.
            e = a_dst + a_src                                           # [N, N]
            e = jnp.maximum(e, 0.2 * e)           # leaky ReLU (slope 0.2 > 0)
            e = jnp.where(neighbor, e, -1e30)     # mask straight from int8 adj

            # Row softmax over neighbors, normalization DEFERRED past the matmul.
            m = jnp.max(e, axis=-1, keepdims=True)
            p = jnp.exp((e - m).astype(exp_dtype))                      # unnormalized
            denom = jnp.sum(p.astype(jnp.float32), axis=-1, keepdims=True)

            # Weighted aggregation (bf16 MXU, f32 accumulate), then scale rows on
            # the small [N, F] result, add bias, fused ReLU.
            out = jnp.dot(p.astype(jnp.bfloat16), hw.astype(jnp.bfloat16),
                          preferred_element_type=jnp.float32)           # [N, Fout]
            out = out * pl.reciprocal(denom, approx=True) + bias_ref[...]
            return jnp.maximum(out, 0.0)

        h = x_ref[...].astype(jnp.float32)
        h = gat_layer(h, w1_ref, as1_ref, ad1_ref, b1_ref)
        h = gat_layer(h, w2_ref, as2_ref, ad2_ref, b2_ref)
        h = gat_layer(h, w3_ref, as3_ref, ad3_ref, b3_ref)

        # global_add_pool: build the [G, N] one-hot in-kernel from the batch ids.
        # Padded nodes carry batch id == num_graphs, so they never match the iota.
        graph_ids = lax.broadcasted_iota(jnp.int32, (num_graphs, n), 0)  # [G, N]
        onehot = (graph_ids == batch_ref[...]).astype(jnp.bfloat16)      # exact in bf16
        pooled = jnp.dot(onehot, h.astype(jnp.bfloat16),
                         preferred_element_type=jnp.float32)             # [G, F]

        # fc1 epilogue (bf16 MXU, f32 accumulate).
        o_ref[...] = jnp.dot(pooled.astype(jnp.bfloat16),
                             wfc_ref[...].astype(jnp.bfloat16),
                             preferred_element_type=jnp.float32) + bfc_ref[...]

    return kernel


# ---------------------------------------------------------------------------
# Generation-aware knobs.
# ---------------------------------------------------------------------------
def _device_kind():
    try:
        return jax.devices()[0].device_kind.lower()
    except Exception:
        return ""


def _supports_bf16_softmax():
    # bf16 EUP/VPU paths exist on v6e/v7x; on v5e (and earlier) bf16 elementwise
    # would just add converts, so stay in f32 there.
    kind = _device_kind()
    return ("v6" in kind) or ("v7" in kind)


def _vmem_limit_bytes(n, f_hidden, use_bf16_softmax):
    # Rough live-set estimate for the fused kernel:
    #   per N^2 element: int8 adj (resident) + one f32 score array + one exp array
    #   plus a handful of [N, F] f32 node-feature buffers and the weights.
    p_bytes = 2 if use_bf16_softmax else 4
    est = n * n * (1 + 4 + p_bytes) + 8 * n * max(f_hidden, 128) * 4 + (4 << 20)
    kind = _device_kind()
    cap = (48 << 20) if "v7" in kind else (100 << 20)   # v7x: 64 MiB physical VMEM
    assert est <= cap, (
        f"fused GAT footprint ~{est >> 20} MiB exceeds the {cap >> 20} MiB budget for "
        f"this TPU generation; use a row-tiled (gridded) attention for graphs this large")
    return int(min(max(est, 16 << 20), cap))


# ---------------------------------------------------------------------------
# Full model forward (single pallas_call).
# ---------------------------------------------------------------------------
def gatconv_model_forward(x, edge_index, batch, params, num_graphs, *, pad_to=8):
    n = x.shape[0]
    dim_in = x.shape[1]
    # Pad node count to a sublane-friendly multiple (use pad_to=128/256 when batching
    # enough graphs to fill the MXU; padded nodes are excluded from pooling below).
    n_pad = ((n + pad_to - 1) // pad_to) * pad_to

    x_p = jnp.zeros((n_pad, dim_in), jnp.float32).at[:n, :].set(x.astype(jnp.float32))
    # Padded nodes get batch id == num_graphs -> excluded by the pooling one-hot.
    batch_p = jnp.full((n_pad,), num_graphs, jnp.int32).at[:n].set(batch.astype(jnp.int32))
    batch_row = batch_p.reshape(1, n_pad)

    # Dense int8 adjacency: adj[i, j] = 1 iff edge j -> i (PyG source->target),
    # plus self-loops (GATConv add_self_loops=True).  Plain-JAX glue outside kernel.
    adj = jnp.zeros((n_pad, n_pad), jnp.int8)
    adj = adj.at[edge_index[1], edge_index[0]].set(1)
    adj = adj.at[jnp.arange(n_pad), jnp.arange(n_pad)].set(1)

    p1, p2, p3, fc = params["conv1"], params["conv2"], params["conv3"], params["fc1"]
    dim_hidden = p1["w"].shape[1]
    dim_out = fc["w"].shape[1]

    use_bf16_softmax = _supports_bf16_softmax()
    kernel = _make_fused_gat_kernel(use_bf16_softmax)
    vmem_limit = _vmem_limit_bytes(n_pad, dim_hidden, use_bf16_softmax)

    return pl.pallas_call(
        kernel,
        out_shape=jax.ShapeDtypeStruct((num_graphs, dim_out), jnp.float32),
        in_specs=[pl.BlockSpec(memory_space=pltpu.MemorySpace.VMEM)] * 17,
        out_specs=pl.BlockSpec(memory_space=pltpu.MemorySpace.VMEM),
        compiler_params=pltpu.CompilerParams(vmem_limit_bytes=vmem_limit),
    )(
        x_p, adj, batch_row,
        p1["w"], p1["att_src"], p1["att_dst"], p1["bias"],
        p2["w"], p2["att_src"], p2["att_dst"], p2["bias"],
        p3["w"], p3["att_src"], p3["att_dst"], p3["bias"],
        fc["w"], fc["b"],
    )


def init_params(key, dim_in, dim_hidden, dim_out):
    keys = jax.random.split(key, 12)

    def conv_params(k0, k1, k2, f_in, f_out):
        return {
            "w": 0.1 * jax.random.normal(k0, (f_in, f_out), jnp.float32),
            "att_src": 0.1 * jax.random.normal(k1, (1, f_out), jnp.float32),
            "att_dst": 0.1 * jax.random.normal(k2, (1, f_out), jnp.float32),
            "bias": jnp.zeros((1, f_out), jnp.float32),
        }

    return {
        "conv1": conv_params(keys[0], keys[1], keys[2], dim_in, dim_hidden),
        "conv2": conv_params(keys[3], keys[4], keys[5], dim_hidden, dim_hidden),
        "conv3": conv_params(keys[6], keys[7], keys[8], dim_hidden, dim_hidden),
        "fc1": {
            "w": 0.1 * jax.random.normal(keys[9], (dim_hidden, dim_out), jnp.float32),
            "b": 0.1 * jax.random.normal(keys[10], (1, dim_out), jnp.float32),
        },
    }


if __name__ == "__main__":
    # Small deterministic problem: 16 nodes, 2 graphs, dim_in=4, dim_hidden=128
    # (lane-dense), dim_out=8.
    key = jax.random.PRNGKey(0)
    k_x, k_e1, k_e2, k_p = jax.random.split(key, 4)

    num_nodes, num_graphs = 16, 2
    dim_in, dim_hidden, dim_out = 4, 128, 8
    num_edges = 40

    x = jax.random.normal(k_x, (num_nodes, dim_in), jnp.float32)

    # Edges constrained within each graph (nodes 0..7 -> graph 0, 8..15 -> graph 1).
    src_local = jax.random.randint(k_e1, (num_edges,), 0, 8)
    dst_local = jax.random.randint(k_e2, (num_edges,), 0, 8)
    graph_of_edge = jnp.repeat(jnp.arange(2), num_edges // 2)
    edge_index = jnp.stack(
        [src_local + 8 * graph_of_edge, dst_local + 8 * graph_of_edge], axis=0
    ).astype(jnp.int32)                                  # [2, E]

    batch = jnp.repeat(jnp.arange(num_graphs), num_nodes // num_graphs).astype(jnp.int32)

    params = init_params(k_p, dim_in, dim_hidden, dim_out)

    out = gatconv_model_forward(x, edge_index, batch, params, num_graphs)
    out = jax.block_until_ready(out)
    assert out.shape == (num_graphs, dim_out)
    assert bool(jnp.all(jnp.isfinite(out)))
    print("KERNEL_OK")
</pallas_src>

<mosaic_0001>
module attributes {stable_mosaic.version = 11 : i64} {
  func.func @kernel(%arg0: memref<16x4xf32, #tpu.memory_space<vmem>>, %arg1: memref<16x16xi8, #tpu.memory_space<vmem>>, %arg2: memref<1x16xi32, #tpu.memory_space<vmem>>, %arg3: memref<4x128xf32, #tpu.memory_space<vmem>>, %arg4: memref<1x128xf32, #tpu.memory_space<vmem>>, %arg5: memref<1x128xf32, #tpu.memory_space<vmem>>, %arg6: memref<1x128xf32, #tpu.memory_space<vmem>>, %arg7: memref<128x128xf32, #tpu.memory_space<vmem>>, %arg8: memref<1x128xf32, #tpu.memory_space<vmem>>, %arg9: memref<1x128xf32, #tpu.memory_space<vmem>>, %arg10: memref<1x128xf32, #tpu.memory_space<vmem>>, %arg11: memref<128x128xf32, #tpu.memory_space<vmem>>, %arg12: memref<1x128xf32, #tpu.memory_space<vmem>>, %arg13: memref<1x128xf32, #tpu.memory_space<vmem>>, %arg14: memref<1x128xf32, #tpu.memory_space<vmem>>, %arg15: memref<128x8xf32, #tpu.memory_space<vmem>>, %arg16: memref<1x8xf32, #tpu.memory_space<vmem>>, %arg17: memref<2x8xf32, #tpu.memory_space<vmem>>) attributes {dimension_semantics = [], scalar_prefetch = 0 : i64, scratch_operands = 0 : i64, tpu.core_type = #tpu.core_type<tc>} {
    %c0 = arith.constant 0 : index
    %c0_0 = arith.constant 0 : index
    %0 = vector.load %arg1[%c0, %c0_0] : memref<16x16xi8, #tpu.memory_space<vmem>>, vector<16x16xi8>
    %c0_i8 = arith.constant 0 : i8
    %1 = vector.broadcast %c0_i8 : i8 to vector<16x16xi8>
    %2 = arith.cmpi ne, %0, %1 : vector<16x16xi8>
    %c0_1 = arith.constant 0 : index
    %c0_2 = arith.constant 0 : index
    %3 = vector.load %arg0[%c0_1, %c0_2] : memref<16x4xf32, #tpu.memory_space<vmem>>, vector<16x4xf32>
    %c0_3 = arith.constant 0 : index
    %c0_4 = arith.constant 0 : index
    %4 = vector.load %arg3[%c0_3, %c0_4] : memref<4x128xf32, #tpu.memory_space<vmem>>, vector<4x128xf32>
    %5 = vector.extract_strided_slice %3 {offsets = [0, 0], sizes = [16, 1], strides = [1, 1]} : vector<16x4xf32> to vector<16x1xf32>
    %6 = vector.extract_strided_slice %4 {offsets = [0, 0], sizes = [1, 128], strides = [1, 1]} : vector<4x128xf32> to vector<1x128xf32>
    %7 = vector.broadcast %5 : vector<16x1xf32> to vector<16x128xf32>
    %8 = vector.broadcast %6 : vector<1x128xf32> to vector<16x128xf32>
    %9 = arith.mulf %7, %8 : vector<16x128xf32>
    %10 = vector.extract_strided_slice %3 {offsets = [0, 1], sizes = [16, 1], strides = [1, 1]} : vector<16x4xf32> to vector<16x1xf32>
    %11 = vector.extract_strided_slice %4 {offsets = [1, 0], sizes = [1, 128], strides = [1, 1]} : vector<4x128xf32> to vector<1x128xf32>
    %12 = vector.broadcast %10 : vector<16x1xf32> to vector<16x128xf32>
    %13 = vector.broadcast %11 : vector<1x128xf32> to vector<16x128xf32>
    %14 = arith.mulf %12, %13 : vector<16x128xf32>
    %15 = arith.addf %9, %14 : vector<16x128xf32>
    %16 = vector.extract_strided_slice %3 {offsets = [0, 2], sizes = [16, 1], strides = [1, 1]} : vector<16x4xf32> to vector<16x1xf32>
    %17 = vector.extract_strided_slice %4 {offsets = [2, 0], sizes = [1, 128], strides = [1, 1]} : vector<4x128xf32> to vector<1x128xf32>
    %18 = vector.broadcast %16 : vector<16x1xf32> to vector<16x128xf32>
    %19 = vector.broadcast %17 : vector<1x128xf32> to vector<16x128xf32>
    %20 = arith.mulf %18, %19 : vector<16x128xf32>
    %21 = arith.addf %15, %20 : vector<16x128xf32>
    %22 = vector.extract_strided_slice %3 {offsets = [0, 3], sizes = [16, 1], strides = [1, 1]} : vector<16x4xf32> to vector<16x1xf32>
    %23 = vector.extract_strided_slice %4 {offsets = [3, 0], sizes = [1, 128], strides = [1, 1]} : vector<4x128xf32> to vector<1x128xf32>
    %24 = vector.broadcast %22 : vector<16x1xf32> to vector<16x128xf32>
    %25 = vector.broadcast %23 : vector<1x128xf32> to vector<16x128xf32>
    %26 = arith.mulf %24, %25 : vector<16x128xf32>
    %27 = arith.addf %21, %26 : vector<16x128xf32>
    %c0_5 = arith.constant 0 : index
    %c0_6 = arith.constant 0 : index
    %28 = vector.load %arg5[%c0_5, %c0_6] : memref<1x128xf32, #tpu.memory_space<vmem>>, vector<1x128xf32>
    %29 = vector.broadcast %28 : vector<1x128xf32> to vector<16x128xf32>
    %30 = arith.mulf %27, %29 : vector<16x128xf32>
    %cst = arith.constant dense<0.000000e+00> : vector<16xf32>
    %31 = vector.multi_reduction <add>, %30, %cst [1] : vector<16x128xf32> to vector<16xf32>
    %32 = vector.shape_cast %31 : vector<16xf32> to vector<16x1xf32>
    %c0_7 = arith.constant 0 : index
    %c0_8 = arith.constant 0 : index
    %33 = vector.load %arg4[%c0_7, %c0_8] : memref<1x128xf32, #tpu.memory_space<vmem>>, vector<1x128xf32>
    %cst_9 = arith.constant dense<0.000000e+00> : vector<1x16xf32>
    %34 = tpu.matmul %33, %27, %cst_9 {dimension_numbers = #tpu.dot_dimension_numbers<[1], [1], [0], [0], [0, 0, 1, 0], [], []>} : vector<1x128xf32>, vector<16x128xf32>, vector<1x16xf32> -> vector<1x16xf32>
    %35 = vector.broadcast %32 : vector<16x1xf32> to vector<16x16xf32>
    %36 = vector.broadcast %34 : vector<1x16xf32> to vector<16x16xf32>
    %37 = arith.addf %35, %36 : vector<16x16xf32>
    %cst_10 = arith.constant 2.000000e-01 : f32
    %38 = vector.broadcast %cst_10 : f32 to vector<16x16xf32>
    %39 = arith.mulf %38, %37 : vector<16x16xf32>
    %40 = arith.maximumf %37, %39 : vector<16x16xf32>
    %cst_11 = arith.constant -1.000000e+30 : f32
    %41 = vector.broadcast %cst_11 : f32 to vector<16x16xf32>
    %42 = arith.select %2, %40, %41 : vector<16x16xi1>, vector<16x16xf32>
    %cst_12 = arith.constant dense<0xFF800000> : vector<16xf32>
    %43 = vector.multi_reduction <maximumf>, %42, %cst_12 [1] : vector<16x16xf32> to vector<16xf32>
    %44 = vector.shape_cast %43 : vector<16xf32> to vector<16x1xf32>
    %45 = vector.broadcast %44 : vector<16x1xf32> to vector<16x16xf32>
    %46 = arith.subf %42, %45 : vector<16x16xf32>
    %47 = math.exp %46 : vector<16x16xf32>
    %cst_13 = arith.constant dense<0.000000e+00> : vector<16xf32>
    %48 = vector.multi_reduction <add>, %47, %cst_13 [1] : vector<16x16xf32> to vector<16xf32>
    %49 = vector.shape_cast %48 : vector<16xf32> to vector<16x1xf32>
    %50 = arith.truncf %47 : vector<16x16xf32> to vector<16x16xbf16>
    %51 = arith.truncf %27 : vector<16x128xf32> to vector<16x128xbf16>
    %cst_14 = arith.constant dense<0.000000e+00> : vector<16x128xf32>
    %52 = tpu.matmul %50, %51, %cst_14 {dimension_numbers = #tpu.dot_dimension_numbers<[1], [0], [0], [1], [0, 0, 1, 1], [], []>} : vector<16x16xbf16>, vector<16x128xbf16>, vector<16x128xf32> -> vector<16x128xf32>
    %53 = tpu.reciprocal %49 {approx = true} : vector<16x1xf32> -> vector<16x1xf32>
    %54 = vector.broadcast %53 : vector<16x1xf32> to vector<16x128xf32>
    %55 = arith.mulf %52, %54 : vector<16x128xf32>
    %c0_15 = arith.constant 0 : index
    %c0_16 = arith.constant 0 : index
    %56 = vector.load %arg6[%c0_15, %c0_16] : memref<1x128xf32, #tpu.memory_space<vmem>>, vector<1x128xf32>
    %57 = vector.broadcast %56 : vector<1x128xf32> to vector<16x128xf32>
    %58 = arith.addf %55, %57 : vector<16x128xf32>
    %cst_17 = arith.constant 0.000000e+00 : f32
    %59 = vector.broadcast %cst_17 : f32 to vector<16x128xf32>
    %60 = arith.maximumf %58, %59 : vector<16x128xf32>
    %c0_18 = arith.constant 0 : index
    %c0_19 = arith.constant 0 : index
    %61 = vector.load %arg7[%c0_18, %c0_19] : memref<128x128xf32, #tpu.memory_space<vmem>>, vector<128x128xf32>
    %62 = arith.truncf %60 : vector<16x128xf32> to vector<16x128xbf16>
    %63 = arith.truncf %61 : vector<128x128xf32> to vector<128x128xbf16>
    %cst_20 = arith.constant dense<0.000000e+00> : vector<16x128xf32>
    %64 = tpu.matmul %62, %63, %cst_20 {dimension_numbers = #tpu.dot_dimension_numbers<[1], [0], [0], [1], [0, 0, 1, 1], [], []>} : vector<16x128xbf16>, vector<128x128xbf16>, vector<16x128xf32> -> vector<16x128xf32>
    %c0_21 = arith.constant 0 : index
    %c0_22 = arith.constant 0 : index
    %65 = vector.load %arg9[%c0_21, %c0_22] : memref<1x128xf32, #tpu.memory_space<vmem>>, vector<1x128xf32>
    %66 = vector.broadcast %65 : vector<1x128xf32> to vector<16x128xf32>
    %67 = arith.mulf %64, %66 : vector<16x128xf32>
    %cst_23 = arith.constant dense<0.000000e+00> : vector<16xf32>
    %68 = vector.multi_reduction <add>, %67, %cst_23 [1] : vector<16x128xf32> to vector<16xf32>
    %69 = vector.shape_cast %68 : vector<16xf32> to vector<16x1xf32>
    %c0_24 = arith.constant 0 : index
    %c0_25 = arith.constant 0 : index
    %70 = vector.load %arg8[%c0_24, %c0_25] : memref<1x128xf32, #tpu.memory_space<vmem>>, vector<1x128xf32>
    %cst_26 = arith.constant dense<0.000000e+00> : vector<1x16xf32>
    %71 = tpu.matmul %70, %64, %cst_26 {dimension_numbers = #tpu.dot_dimension_numbers<[1], [1], [0], [0], [0, 0, 1, 0], [], []>} : vector<1x128xf32>, vector<16x128xf32>, vector<1x16xf32> -> vector<1x16xf32>
    %72 = vector.broadcast %69 : vector<16x1xf32> to vector<16x16xf32>
    %73 = vector.broadcast %71 : vector<1x16xf32> to vector<16x16xf32>
    %74 = arith.addf %72, %73 : vector<16x16xf32>
    %cst_27 = arith.constant 2.000000e-01 : f32
    %75 = vector.broadcast %cst_27 : f32 to vector<16x16xf32>
    %76 = arith.mulf %75, %74 : vector<16x16xf32>
    %77 = arith.maximumf %74, %76 : vector<16x16xf32>
    %cst_28 = arith.constant -1.000000e+30 : f32
    %78 = vector.broadcast %cst_28 : f32 to vector<16x16xf32>
    %79 = arith.select %2, %77, %78 : vector<16x16xi1>, vector<16x16xf32>
    %cst_29 = arith.constant dense<0xFF800000> : vector<16xf32>
    %80 = vector.multi_reduction <maximumf>, %79, %cst_29 [1] : vector<16x16xf32> to vector<16xf32>
    %81 = vector.shape_cast %80 : vector<16xf32> to vector<16x1xf32>
    %82 = vector.broadcast %81 : vector<16x1xf32> to vector<16x16xf32>
    %83 = arith.subf %79, %82 : vector<16x16xf32>
    %84 = math.exp %83 : vector<16x16xf32>
    %cst_30 = arith.constant dense<0.000000e+00> : vector<16xf32>
    %85 = vector.multi_reduction <add>, %84, %cst_30 [1] : vector<16x16xf32> to vector<16xf32>
    %86 = vector.shape_cast %85 : vector<16xf32> to vector<16x1xf32>
    %87 = arith.truncf %84 : vector<16x16xf32> to vector<16x16xbf16>
    %88 = arith.truncf %64 : vector<16x128xf32> to vector<16x128xbf16>
    %cst_31 = arith.constant dense<0.000000e+00> : vector<16x128xf32>
    %89 = tpu.matmul %87, %88, %cst_31 {dimension_numbers = #tpu.dot_dimension_numbers<[1], [0], [0], [1], [0, 0, 1, 1], [], []>} : vector<16x16xbf16>, vector<16x128xbf16>, vector<16x128xf32> -> vector<16x128xf32>
    %90 = tpu.reciprocal %86 {approx = true} : vector<16x1xf32> -> vector<16x1xf32>
    %91 = vector.broadcast %90 : vector<16x1xf32> to vector<16x128xf32>
    %92 = arith.mulf %89, %91 : vector<16x128xf32>
    %c0_32 = arith.constant 0 : index
    %c0_33 = arith.constant 0 : index
    %93 = vector.load %arg10[%c0_32, %c0_33] : memref<1x128xf32, #tpu.memory_space<vmem>>, vector<1x128xf32>
    %94 = vector.broadcast %93 : vector<1x128xf32> to vector<16x128xf32>
    %95 = arith.addf %92, %94 : vector<16x128xf32>
    %cst_34 = arith.constant 0.000000e+00 : f32
    %96 = vector.broadcast %cst_34 : f32 to vector<16x128xf32>
    %97 = arith.maximumf %95, %96 : vector<16x128xf32>
    %c0_35 = arith.constant 0 : index
    %c0_36 = arith.constant 0 : index
    %98 = vector.load %arg11[%c0_35, %c0_36] : memref<128x128xf32, #tpu.memory_space<vmem>>, vector<128x128xf32>
    %99 = arith.truncf %97 : vector<16x128xf32> to vector<16x128xbf16>
    %100 = arith.truncf %98 : vector<128x128xf32> to vector<128x128xbf16>
    %cst_37 = arith.constant dense<0.000000e+00> : vector<16x128xf32>
    %101 = tpu.matmul %99, %100, %cst_37 {dimension_numbers = #tpu.dot_dimension_numbers<[1], [0], [0], [1], [0, 0, 1, 1], [], []>} : vector<16x128xbf16>, vector<128x128xbf16>, vector<16x128xf32> -> vector<16x128xf32>
    %c0_38 = arith.constant 0 : index
    %c0_39 = arith.constant 0 : index
    %102 = vector.load %arg13[%c0_38, %c0_39] : memref<1x128xf32, #tpu.memory_space<vmem>>, vector<1x128xf32>
    %103 = vector.broadcast %102 : vector<1x128xf32> to vector<16x128xf32>
    %104 = arith.mulf %101, %103 : vector<16x128xf32>
    %cst_40 = arith.constant dense<0.000000e+00> : vector<16xf32>
    %105 = vector.multi_reduction <add>, %104, %cst_40 [1] : vector<16x128xf32> to vector<16xf32>
    %106 = vector.shape_cast %105 : vector<16xf32> to vector<16x1xf32>
    %c0_41 = arith.constant 0 : index
    %c0_42 = arith.constant 0 : index
    %107 = vector.load %arg12[%c0_41, %c0_42] : memref<1x128xf32, #tpu.memory_space<vmem>>, vector<1x128xf32>
    %cst_43 = arith.constant dense<0.000000e+00> : vector<1x16xf32>
    %108 = tpu.matmul %107, %101, %cst_43 {dimension_numbers = #tpu.dot_dimension_numbers<[1], [1], [0], [0], [0, 0, 1, 0], [], []>} : vector<1x128xf32>, vector<16x128xf32>, vector<1x16xf32> -> vector<1x16xf32>
    %109 = vector.broadcast %106 : vector<16x1xf32> to vector<16x16xf32>
    %110 = vector.broadcast %108 : vector<1x16xf32> to vector<16x16xf32>
    %111 = arith.addf %109, %110 : vector<16x16xf32>
    %cst_44 = arith.constant 2.000000e-01 : f32
    %112 = vector.broadcast %cst_44 : f32 to vector<16x16xf32>
    %113 = arith.mulf %112, %111 : vector<16x16xf32>
    %114 = arith.maximumf %111, %113 : vector<16x16xf32>
    %cst_45 = arith.constant -1.000000e+30 : f32
    %115 = vector.broadcast %cst_45 : f32 to vector<16x16xf32>
    %116 = arith.select %2, %114, %115 : vector<16x16xi1>, vector<16x16xf32>
    %cst_46 = arith.constant dense<0xFF800000> : vector<16xf32>
    %117 = vector.multi_reduction <maximumf>, %116, %cst_46 [1] : vector<16x16xf32> to vector<16xf32>
    %118 = vector.shape_cast %117 : vector<16xf32> to vector<16x1xf32>
    %119 = vector.broadcast %118 : vector<16x1xf32> to vector<16x16xf32>
    %120 = arith.subf %116, %119 : vector<16x16xf32>
    %121 = math.exp %120 : vector<16x16xf32>
    %cst_47 = arith.constant dense<0.000000e+00> : vector<16xf32>
    %122 = vector.multi_reduction <add>, %121, %cst_47 [1] : vector<16x16xf32> to vector<16xf32>
    %123 = vector.shape_cast %122 : vector<16xf32> to vector<16x1xf32>
    %124 = arith.truncf %121 : vector<16x16xf32> to vector<16x16xbf16>
    %125 = arith.truncf %101 : vector<16x128xf32> to vector<16x128xbf16>
    %cst_48 = arith.constant dense<0.000000e+00> : vector<16x128xf32>
    %126 = tpu.matmul %124, %125, %cst_48 {dimension_numbers = #tpu.dot_dimension_numbers<[1], [0], [0], [1], [0, 0, 1, 1], [], []>} : vector<16x16xbf16>, vector<16x128xbf16>, vector<16x128xf32> -> vector<16x128xf32>
    %127 = tpu.reciprocal %123 {approx = true} : vector<16x1xf32> -> vector<16x1xf32>
    %128 = vector.broadcast %127 : vector<16x1xf32> to vector<16x128xf32>
    %129 = arith.mulf %126, %128 : vector<16x128xf32>
    %c0_49 = arith.constant 0 : index
    %c0_50 = arith.constant 0 : index
    %130 = vector.load %arg14[%c0_49, %c0_50] : memref<1x128xf32, #tpu.memory_space<vmem>>, vector<1x128xf32>
    %131 = vector.broadcast %130 : vector<1x128xf32> to vector<16x128xf32>
    %132 = arith.addf %129, %131 : vector<16x128xf32>
    %cst_51 = arith.constant 0.000000e+00 : f32
    %133 = vector.broadcast %cst_51 : f32 to vector<16x128xf32>
    %134 = arith.maximumf %132, %133 : vector<16x128xf32>
    %135 = tpu.iota {dimensions = array<i32: 0>} : vector<2x16xi32>
    %c0_52 = arith.constant 0 : index
    %c0_53 = arith.constant 0 : index
    %136 = vector.load %arg2[%c0_52, %c0_53] : memref<1x16xi32, #tpu.memory_space<vmem>>, vector<1x16xi32>
    %137 = vector.broadcast %136 : vector<1x16xi32> to vector<2x16xi32>
    %138 = arith.cmpi eq, %135, %137 : vector<2x16xi32>
    %139 = arith.extui %138 : vector<2x16xi1> to vector<2x16xi32>
    %140 = arith.sitofp %139 : vector<2x16xi32> to vector<2x16xf32>
    %141 = arith.truncf %140 : vector<2x16xf32> to vector<2x16xbf16>
    %142 = arith.truncf %134 : vector<16x128xf32> to vector<16x128xbf16>
    %cst_54 = arith.constant dense<0.000000e+00> : vector<2x128xf32>
    %143 = tpu.matmul %141, %142, %cst_54 {dimension_numbers = #tpu.dot_dimension_numbers<[1], [0], [0], [1], [0, 0, 1, 1], [], []>} : vector<2x16xbf16>, vector<16x128xbf16>, vector<2x128xf32> -> vector<2x128xf32>
    %144 = arith.truncf %143 : vector<2x128xf32> to vector<2x128xbf16>
    %c0_55 = arith.constant 0 : index
    %c0_56 = arith.constant 0 : index
    %145 = vector.load %arg15[%c0_55, %c0_56] : memref<128x8xf32, #tpu.memory_space<vmem>>, vector<128x8xf32>
    %146 = arith.truncf %145 : vector<128x8xf32> to vector<128x8xbf16>
    %cst_57 = arith.constant dense<0.000000e+00> : vector<2x8xf32>
    %147 = tpu.matmul %144, %146, %cst_57 {dimension_numbers = #tpu.dot_dimension_numbers<[1], [0], [0], [1], [0, 0, 1, 1], [], []>} : vector<2x128xbf16>, vector<128x8xbf16>, vector<2x8xf32> -> vector<2x8xf32>
    %c0_58 = arith.constant 0 : index
    %c0_59 = arith.constant 0 : index
    %148 = vector.load %arg16[%c0_58, %c0_59] : memref<1x8xf32, #tpu.memory_space<vmem>>, vector<1x8xf32>
    %149 = vector.broadcast %148 : vector<1x8xf32> to vector<2x8xf32>
    %150 = arith.addf %147, %149 : vector<2x8xf32>
    %c0_60 = arith.constant 0 : index
    %c0_61 = arith.constant 0 : index
    %151 = vector.load %arg17[%c0_60, %c0_61] : memref<2x8xf32, #tpu.memory_space<vmem>>, vector<2x8xf32>
    tpu.vector_store %arg17[%c0_60, %c0_61], %150 {strides = array<i32>} : memref<2x8xf32, #tpu.memory_space<vmem>>, vector<2x8xf32>,
    return
  }
}

</mosaic_0001>

<llo_original>
// kernel: tpu_custom_call.1
$region0: #{tpu_custom_call.1}
  #allocation0 [shape = 'u32[]', space=smem, size = 0x4, offset = 0x4, fixed_abs, tag = 'smem constant byte address 0x4 - core index']
  #allocation1 [shape = 'u32[72,128]{1,0:T(1,128)}', space=vmem, size = 0x9000, scoped, tag = 'internal scratch']
  %s0 = inlined_call_operand.vmem [shape: f32[16,4], index: 0, kind: input, shape index: {}]
  %s1 = inlined_call_operand.vmem [shape: s8[16,16], index: 1, kind: input, shape index: {}]
  %s2 = inlined_call_operand.vmem [shape: s32[1,16], index: 2, kind: input, shape index: {}]
  %s3 = inlined_call_operand.vmem [shape: f32[4,128], index: 3, kind: input, shape index: {}]
  %s4 = inlined_call_operand.vmem [shape: f32[1,128], index: 4, kind: input, shape index: {}]
  %s5 = inlined_call_operand.vmem [shape: f32[1,128], index: 5, kind: input, shape index: {}]
  %s6 = inlined_call_operand.vmem [shape: f32[1,128], index: 6, kind: input, shape index: {}]
  %s7 = inlined_call_operand.vmem [shape: f32[128,128], index: 7, kind: input, shape index: {}]
  %s8 = inlined_call_operand.vmem [shape: f32[1,128], index: 8, kind: input, shape index: {}]
  %s9 = inlined_call_operand.vmem [shape: f32[1,128], index: 9, kind: input, shape index: {}]
  %s10 = inlined_call_operand.vmem [shape: f32[1,128], index: 10, kind: input, shape index: {}]
  %s11 = inlined_call_operand.hbm [shape: f32[128,128], index: 11, kind: input, shape index: {}]
  %s12 = inlined_call_operand.vmem [shape: f32[1,128], index: 12, kind: input, shape index: {}]
  %s13 = inlined_call_operand.vmem [shape: f32[1,128], index: 13, kind: input, shape index: {}]
  %s14 = inlined_call_operand.vmem [shape: f32[1,128], index: 14, kind: input, shape index: {}]
  %s15 = inlined_call_operand.vmem [shape: f32[128,8], index: 15, kind: input, shape index: {}]
  %s16 = inlined_call_operand.vmem [shape: f32[1,8], index: 16, kind: input, shape index: {}]
  %s17 = inlined_call_operand.hbm [shape: f32[2,8], index: 17, kind: output, shape index: {}]
  %s18 = sld [smem:[#allocation0]]
  $region82: #{tpu_custom_call.1} parent=0
    _
  %s20 = ssub.s32 1, %s18
  %s21 = scalar_select 0, %s20, %s18
  $region1: #{tpu_custom_call.1} parent=0
    #allocation2 [shape = 'u8[65536]{0}', space=vmem, size = 0x10000, scoped, tag = 'input window, operand 11, single buffered']
    #allocation3 [shape = 's32[1]{0}', space=sflag, size = 0x4, scoped, tag = 'scoped memory for tpu_custom_call.1']
    #allocation4 [shape = 's32[1]{0}', space=sflag, size = 0x4, scoped, tag = 'scoped memory for tpu_custom_call.1']
    #allocation5 [shape = 'u8[1024]{0}', space=vmem, size = 0x400, scoped, tag = 'output window, operand 0, single buffered']
    %22 = vsyncpa [#allocation3], 0
    %23 = vsyncpa [#allocation4], 0
    // Predicated region
    $region2: #{tpu_custom_call.1} parent=1 // pred_check
      _
    $region3: #{tpu_custom_call.1} parent=1 // pred_check_branch
      %25 = sbr.rel (0) target = $region5
    $region4: #{tpu_custom_call.1} parent=1 // pred_region
      _
    $region5: #{tpu_custom_call.1} parent=1 // pred_fallthru
      _
    // Predicated region
    $region6: #{tpu_custom_call.1} parent=1 // pred_check
      _
    $region7: #{tpu_custom_call.1} parent=1 // pred_check_branch
      %27 = sbr.rel (0) target = $region9
    $region8: #{tpu_custom_call.1} parent=1 // pred_region
      _
    $region9: #{tpu_custom_call.1} parent=1 // pred_fallthru
      _
    // Predicated region
    $region10: #{tpu_custom_call.1} parent=1 // pred_check
      _
    $region11: #{tpu_custom_call.1} parent=1 // pred_check_branch
      %29 = sbr.rel (0) target = $region13
    $region12: #{tpu_custom_call.1} parent=1 // pred_region
      _
    $region13: #{tpu_custom_call.1} parent=1 // pred_fallthru
      _
    // Predicated region
    $region14: #{tpu_custom_call.1} parent=1 // pred_check
      _
    $region15: #{tpu_custom_call.1} parent=1 // pred_check_branch
      %31 = sbr.rel (0) target = $region17
    $region16: #{tpu_custom_call.1} parent=1 // pred_region
      _
    $region17: #{tpu_custom_call.1} parent=1 // pred_fallthru
      _
    // Predicated region
    $region18: #{tpu_custom_call.1} parent=1 // pred_check
      _
    $region19: #{tpu_custom_call.1} parent=1 // pred_check_branch
      %33 = sbr.rel (0) target = $region21
    $region20: #{tpu_custom_call.1} parent=1 // pred_region
      _
    $region21: #{tpu_custom_call.1} parent=1 // pred_fallthru
      _
    // Predicated region
    $region22: #{tpu_custom_call.1} parent=1 // pred_check
      _
    $region23: #{tpu_custom_call.1} parent=1 // pred_check_branch
      %35 = sbr.rel (0) target = $region25
    $region24: #{tpu_custom_call.1} parent=1 // pred_region
      _
    $region25: #{tpu_custom_call.1} parent=1 // pred_fallthru
      _
    // Predicated region
    $region26: #{tpu_custom_call.1} parent=1 // pred_check
      _
    $region27: #{tpu_custom_call.1} parent=1 // pred_check_branch
      %37 = sbr.rel (0) target = $region29
    $region28: #{tpu_custom_call.1} parent=1 // pred_region
      _
    $region29: #{tpu_custom_call.1} parent=1 // pred_fallthru
      _
    // Predicated region
    $region30: #{tpu_custom_call.1} parent=1 // pred_check
      _
    $region31: #{tpu_custom_call.1} parent=1 // pred_check_branch
      %39 = sbr.rel (0) target = $region33
    $region32: #{tpu_custom_call.1} parent=1 // pred_region
      _
    $region33: #{tpu_custom_call.1} parent=1 // pred_fallthru
      _
    // Predicated region
    $region34: #{tpu_custom_call.1} parent=1 // pred_check
      _
    $region35: #{tpu_custom_call.1} parent=1 // pred_check_branch
      %41 = sbr.rel (0) target = $region37
    $region36: #{tpu_custom_call.1} parent=1 // pred_region
      _
    $region37: #{tpu_custom_call.1} parent=1 // pred_fallthru
      _
    // Predicated region
    $region38: #{tpu_custom_call.1} parent=1 // pred_check
      _
    $region39: #{tpu_custom_call.1} parent=1 // pred_check_branch
      %43 = sbr.rel (0) target = $region41
    $region40: #{tpu_custom_call.1} parent=1 // pred_region
      _
    $region41: #{tpu_custom_call.1} parent=1 // pred_fallthru
      _
    // Predicated region
    $region42: #{tpu_custom_call.1} parent=1 // pred_check
      _
    $region43: #{tpu_custom_call.1} parent=1 // pred_check_branch
      %45 = sbr.rel (0) target = $region45
    $region44: #{tpu_custom_call.1} parent=1 // pred_region
      _
    $region45: #{tpu_custom_call.1} parent=1 // pred_fallthru
      _
    // Predicated region
    $region46: #{tpu_custom_call.1} parent=1 // pred_check
      _
    $region47: #{tpu_custom_call.1} parent=1 // pred_check_branch
      %47 = sbr.rel (0) target = $region49
    $region48: #{tpu_custom_call.1} parent=1 // pred_region
      %49 = vsyncadd [#allocation3], 0
      %s50 = sshll.u32 %s11, 4
      %s51 = int_to_ptr.hbm [resolvable:$true] %s50
      %s52 = sshll.u32 [#allocation2], 4
      %s53 = int_to_ptr.vmem [resolvable:$true] %s52
      %58 = dma.hbm_to_vmem [thread:$0]  %s51, 2048, %s53, [#allocation3], 128, 128, 8
    $region49: #{tpu_custom_call.1} parent=1 // pred_fallthru
      _
    // Predicated region
    $region50: #{tpu_custom_call.1} parent=1 // pred_check
      _
    $region51: #{tpu_custom_call.1} parent=1 // pred_check_branch
      %60 = sbr.rel (0) target = $region53
    $region52: #{tpu_custom_call.1} parent=1 // pred_region
      _
    $region53: #{tpu_custom_call.1} parent=1 // pred_fallthru
      _
    // Predicated region
    $region54: #{tpu_custom_call.1} parent=1 // pred_check
      _
    $region55: #{tpu_custom_call.1} parent=1 // pred_check_branch
      %62 = sbr.rel (0) target = $region57
    $region56: #{tpu_custom_call.1} parent=1 // pred_region
      _
    $region57: #{tpu_custom_call.1} parent=1 // pred_fallthru
      _
    // Predicated region
    $region58: #{tpu_custom_call.1} parent=1 // pred_check
      _
    $region59: #{tpu_custom_call.1} parent=1 // pred_check_branch
      %64 = sbr.rel (0) target = $region61
    $region60: #{tpu_custom_call.1} parent=1 // pred_region
      _
    $region61: #{tpu_custom_call.1} parent=1 // pred_fallthru
      _
    // Predicated region
    $region62: #{tpu_custom_call.1} parent=1 // pred_check
      _
    $region63: #{tpu_custom_call.1} parent=1 // pred_check_branch
      %66 = sbr.rel (0) target = $region65
    $region64: #{tpu_custom_call.1} parent=1 // pred_region
      _
    $region65: #{tpu_custom_call.1} parent=1 // pred_fallthru
      _
    // Predicated region
    $region66: #{tpu_custom_call.1} parent=1 // pred_check
      _
    $region67: #{tpu_custom_call.1} parent=1 // pred_check_branch
      %68 = sbr.rel (0) target = $region69
    $region68: #{tpu_custom_call.1} parent=1 // pred_region
      _
    $region69: #{tpu_custom_call.1} parent=1 // pred_fallthru
      _
    // Predicated region
    $region70: #{tpu_custom_call.1} parent=1 // pred_check
      _
    $region71: #{tpu_custom_call.1} parent=1 // pred_check_branch
      %70 = sbr.rel (0) target = $region73
    $region72: #{tpu_custom_call.1} parent=1 // pred_region
      %72 = dma.done [#allocation3], 2048
    $region73: #{tpu_custom_call.1} parent=1 // pred_fallthru
      _
    %v76 = vld [vmem:[%s1] sm:$0x3]
    %v77 = vld [vmem:[%s1 + $0x2] sm:$0x3]
    %vm78 = vnez %v76
    %vm79 = vnez %v77
    %v80 = vld [vmem:[%s0] sm:$0xff]
    %v81 = vld [vmem:[%s0 + $0x8] sm:$0xff]
    %v82 = vld [vmem:[%s3] sm:$0xf]
    %84 = vset.pattern.permute.xlu0 0
    %85 = vperm.xlu0 %84, %v80
    %v86 = vpop.permute.xlu0 %85
    %89 = vset.pattern.permute.xlu0 0
    %90 = vperm.xlu0 %89, %v81
    %v91 = vpop.permute.xlu0 %90
    %v93 = vperm.slane %v82, 0
    %v94 = vmul.f32 %v86, %v93
    %v95 = vmul.f32 %v91, %v93
    %96 = vset.pattern.permute.xlu0 1
    %97 = vperm.xlu0 %96, %v80
    %v98 = vpop.permute.xlu0 %97
    %100 = vset.pattern.permute.xlu0 1
    %101 = vperm.xlu0 %100, %v81
    %v102 = vpop.permute.xlu0 %101
    %v104 = vperm.slane %v82, 1
    %v105 = vmul.f32 %v98, %v104
    %v106 = vmul.f32 %v102, %v104
    %v107 = vadd.f32 %v94, %v105
    %v108 = vadd.f32 %v95, %v106
    %109 = vset.pattern.permute.xlu0 2
    %110 = vperm.xlu0 %109, %v80
    %v111 = vpop.permute.xlu0 %110
    %113 = vset.pattern.permute.xlu0 2
    %114 = vperm.xlu0 %113, %v81
    %v115 = vpop.permute.xlu0 %114
    %v117 = vperm.slane %v82, 2
    %v118 = vmul.f32 %v111, %v117
    %v119 = vmul.f32 %v115, %v117
    %v120 = vadd.f32 %v107, %v118
    %v121 = vadd.f32 %v108, %v119
    %122 = vset.pattern.permute.xlu0 3
    %123 = vperm.xlu0 %122, %v80
    %v124 = vpop.permute.xlu0 %123
    %126 = vset.pattern.permute.xlu0 3
    %127 = vperm.xlu0 %126, %v81
    %v128 = vpop.permute.xlu0 %127
    %v130 = vperm.slane %v82, 3
    %v131 = vmul.f32 %v124, %v130
    %v132 = vmul.f32 %v128, %v130
    %v133 = vadd.f32 %v120, %v131
    %v134 = vadd.f32 %v121, %v132
    %v135 = vld [vmem:[%s5] sm:$0x1]
    %v137 = vperm.slane %v135, 0
    %v139 = vmul.f32 %v133, %v137
    %v140 = vmul.f32 %v134, %v137
    %141 = vadd.xlane.f32.xlu0 %v139
    %v142 = vpop.xlane.xlu0 %141
    %143 = vadd.xlane.f32.xlu0 %v140
    %v144 = vpop.xlane.xlu0 %143
    %v145 = vld [vmem:[%s4] sm:$0x1]
    %146 = vmatpush.xpose.msra.mxu0 0.0
    %147 = vmatpush.xpose.msra.mxu0 0.0
    %148 = vmatpush.xpose.msra.mxu0 0.0
    %149 = vmatpush.xpose.msra.mxu0 0.0
    %150 = vmatpush.xpose.msra.mxu0 0.0
    %151 = vmatpush.xpose.msra.mxu0 0.0
    %152 = vmatpush.xpose.msra.mxu0 0.0
    %153 = vmatpush.xpose.msra.mxu0 0.0
    %154 = vmatpush.xpose.msra.mxu0 0.0
    %155 = vmatpush.xpose.msra.mxu0 0.0
    %156 = vmatpush.xpose.msra.mxu0 0.0
    %157 = vmatpush.xpose.msra.mxu0 0.0
    %158 = vmatpush.xpose.msra.mxu0 0.0
    %159 = vmatpush.xpose.msra.mxu0 0.0
    %160 = vmatpush.xpose.msra.mxu0 %v134
    %161 = vmatpush.xpose.msra.mxu0 %v133
    %162 = vmatmul.f32.gmra.mxu0 %v145
    %v163 = vpop.f32.mrf.mxu0
    %v164 = vadd.f32 0.0, %v163
    %165 = vdwg.mxu0
    %v166 = vperm.slane %v164, 0
    %v167 = vadd.f32 %v142, %v166
    %v168 = vadd.f32 %v144, %v166
    %v169 = vmul.f32 %v167, 0.2
    %v170 = vmul.f32 %v168, 0.2
    %v171 = vmax.f32 %v167, %v169
    %v172 = vmax.f32 %v168, %v170
    %v173 = vsel %vm78, 16843009, 0
    %v174 = vsel %vm79, 16843009, 0
    %v175 = vunpack.c.0.s8 %v173
    %v176 = vunpack.c.0.s8 %v174
    %vm177 = vcmp.ne.s32.totalorder %v175, 0
    %vm178 = vcmp.ne.s32.totalorder %v176, 0
    %v179 = vsel %vm177, %v171, -1e+30
    %v180 = vsel %vm178, %v172, -1e+30
    %vm181 = vcmask 130048
    %v182 = vsel %vm181, %v179, -inf
    %183 = vmax.xlane.f32.xlu0 %v182
    %v184 = vpop.xlane.xlu0 %183
    %v185 = vsel %vm181, %v180, -inf
    %186 = vmax.xlane.f32.xlu0 %v185
    %v187 = vpop.xlane.xlu0 %186
    %v188 = vsub.f32 %v179, %v184
    %v189 = vsub.f32 %v180, %v187
    %v190 = vmul.f32 %v188, 1.442695
    %v191 = vpow.pop %v190
    %v192 = vmul.f32 %v189, 1.442695
    %v193 = vpow.pop %v192
    %v194 = vsel %vm181, %v191, 0.0
    %195 = vadd.xlane.f32.xlu0 %v194
    %v196 = vpop.xlane.xlu0 %195
    %v197 = vsel %vm181, %v193, 0.0
    %198 = vadd.xlane.f32.xlu0 %v197
    %v199 = vpop.xlane.xlu0 %198
    %v200 = vpack.c.bf16 %v193, %v191
    %v201 = vpack.c.bf16 %v134, %v133
    %v203 = vsel %vm181, %v200, 0
    %205 = vmatpush.bf16.msra.mxu0 0
    %206 = vmatpush.bf16.msra.mxu0 0
    %207 = vmatpush.bf16.msra.mxu0 0
    %208 = vmatpush.bf16.msra.mxu0 0
    %209 = vmatpush.bf16.msra.mxu0 0
    %210 = vmatpush.bf16.msra.mxu0 0
    %211 = vmatpush.bf16.msra.mxu0 0
    %212 = vmatpush.bf16.msra.mxu0 %v201
    %213 = vmatmul.bf16.gmra.mxu0 %v203
    %v214 = vpop.f32.mrf.mxu0
    %v215 = vadd.f32 0.0, %v214
    %v216 = vpop.f32.mrf.mxu0
    %v217 = vadd.f32 0.0, %v216
    %218 = vdwg.mxu0
    %v219 = vrcp.pop %v196
    %v220 = vrcp.pop %v199
    %v221 = vmul.f32 %v215, %v219
    %v222 = vmul.f32 %v217, %v220
    %v223 = vld [vmem:[%s6] sm:$0x1]
    %v225 = vperm.slane %v223, 0
    %v227 = vadd.f32 %v221, %v225
    %v228 = vadd.f32 %v222, %v225
    %v229 = vmax.f32 %v227, 0.0
    %v230 = vmax.f32 %v228, 0.0
    %v231 = vld [vmem:[%s7] sm:$0xff]
    %v232 = vld [vmem:[%s7 + $0x8] sm:$0xff]
    %v233 = vld [vmem:[%s7 + $0x10] sm:$0xff]
    %v234 = vld [vmem:[%s7 + $0x18] sm:$0xff]
    %v235 = vld [vmem:[%s7 + $0x20] sm:$0xff]
    %v236 = vld [vmem:[%s7 + $0x28] sm:$0xff]
    %v237 = vld [vmem:[%s7 + $0x30] sm:$0xff]
    %v238 = vld [vmem:[%s7 + $0x38] sm:$0xff]
    %v239 = vld [vmem:[%s7 + $0x40] sm:$0xff]
    %v240 = vld [vmem:[%s7 + $0x48] sm:$0xff]
    %v241 = vld [vmem:[%s7 + $0x50] sm:$0xff]
    %v242 = vld [vmem:[%s7 + $0x58] sm:$0xff]
    %v243 = vld [vmem:[%s7 + $0x60] sm:$0xff]
    %v244 = vld [vmem:[%s7 + $0x68] sm:$0xff]
    %v245 = vld [vmem:[%s7 + $0x70] sm:$0xff]
    %v246 = vld [vmem:[%s7 + $0x78] sm:$0xff]
    %v247 = vpack.c.bf16 %v230, %v229
    %v248 = vpack.c.bf16 %v232, %v231
    %v249 = vpack.c.bf16 %v234, %v233
    %v250 = vpack.c.bf16 %v236, %v235
    %v251 = vpack.c.bf16 %v238, %v237
    %v252 = vpack.c.bf16 %v240, %v239
    %v253 = vpack.c.bf16 %v242, %v241
    %v254 = vpack.c.bf16 %v244, %v243
    %v255 = vpack.c.bf16 %v246, %v245
    %256 = vmatpush.bf16.msra.mxu0 %v255
    %257 = vmatpush.bf16.msra.mxu0 %v254
    %258 = vmatpush.bf16.msra.mxu0 %v253
    %259 = vmatpush.bf16.msra.mxu0 %v252
    %260 = vmatpush.bf16.msra.mxu0 %v251
    %261 = vmatpush.bf16.msra.mxu0 %v250
    %262 = vmatpush.bf16.msra.mxu0 %v249
    %263 = vmatpush.bf16.msra.mxu0 %v248
    %264 = vmatmul.bf16.gmra.mxu0 %v247
    %v265 = vpop.f32.mrf.mxu0
    %v266 = vadd.f32 0.0, %v265
    %v267 = vpop.f32.mrf.mxu0
    %v268 = vadd.f32 0.0, %v267
    %269 = vdwg.mxu0
    %v270 = vld [vmem:[%s9] sm:$0x1]
    %v272 = vperm.slane %v270, 0
    %v274 = vmul.f32 %v266, %v272
    %v275 = vmul.f32 %v268, %v272
    %276 = vadd.xlane.f32.xlu0 %v274
    %v277 = vpop.xlane.xlu0 %276
    %278 = vadd.xlane.f32.xlu0 %v275
    %v279 = vpop.xlane.xlu0 %278
    %v280 = vld [vmem:[%s8] sm:$0x1]
    %281 = vmatpush.xpose.msra.mxu0 0.0
    %282 = vmatpush.xpose.msra.mxu0 0.0
    %283 = vmatpush.xpose.msra.mxu0 0.0
    %284 = vmatpush.xpose.msra.mxu0 0.0
    %285 = vmatpush.xpose.msra.mxu0 0.0
    %286 = vmatpush.xpose.msra.mxu0 0.0
    %287 = vmatpush.xpose.msra.mxu0 0.0
    %288 = vmatpush.xpose.msra.mxu0 0.0
    %289 = vmatpush.xpose.msra.mxu0 0.0
    %290 = vmatpush.xpose.msra.mxu0 0.0
    %291 = vmatpush.xpose.msra.mxu0 0.0
    %292 = vmatpush.xpose.msra.mxu0 0.0
    %293 = vmatpush.xpose.msra.mxu0 0.0
    %294 = vmatpush.xpose.msra.mxu0 0.0
    %295 = vmatpush.xpose.msra.mxu0 %v268
    %296 = vmatpush.xpose.msra.mxu0 %v266
    %297 = vmatmul.f32.gmra.mxu0 %v280
    %v298 = vpop.f32.mrf.mxu0
    %v299 = vadd.f32 0.0, %v298
    %300 = vdwg.mxu0
    %v301 = vperm.slane %v299, 0
    %v302 = vadd.f32 %v277, %v301
    %v303 = vadd.f32 %v279, %v301
    %v304 = vmul.f32 %v302, 0.2
    %v305 = vmul.f32 %v303, 0.2
    %v306 = vmax.f32 %v302, %v304
    %v307 = vmax.f32 %v303, %v305
    %v308 = vsel %vm177, %v306, -1e+30
    %v309 = vsel %vm178, %v307, -1e+30
    %v310 = vsel %vm181, %v308, -inf
    %311 = vmax.xlane.f32.xlu0 %v310
    %v312 = vpop.xlane.xlu0 %311
    %v313 = vsel %vm181, %v309, -inf
    %314 = vmax.xlane.f32.xlu0 %v313
    %v315 = vpop.xlane.xlu0 %314
    %v316 = vsub.f32 %v308, %v312
    %v317 = vsub.f32 %v309, %v315
    %v318 = vmul.f32 %v316, 1.442695
    %v319 = vpow.pop %v318
    %v320 = vmul.f32 %v317, 1.442695
    %v321 = vpow.pop %v320
    %v322 = vsel %vm181, %v319, 0.0
    %323 = vadd.xlane.f32.xlu0 %v322
    %v324 = vpop.xlane.xlu0 %323
    %v325 = vsel %vm181, %v321, 0.0
    %326 = vadd.xlane.f32.xlu0 %v325
    %v327 = vpop.xlane.xlu0 %326
    %v328 = vpack.c.bf16 %v321, %v319
    %v329 = vpack.c.bf16 %v268, %v266
    %v331 = vsel %vm181, %v328, 0
    %333 = vmatpush.bf16.msra.mxu0 0
    %334 = vmatpush.bf16.msra.mxu0 0
    %335 = vmatpush.bf16.msra.mxu0 0
    %336 = vmatpush.bf16.msra.mxu0 0
    %337 = vmatpush.bf16.msra.mxu0 0
    %338 = vmatpush.bf16.msra.mxu0 0
    %339 = vmatpush.bf16.msra.mxu0 0
    %340 = vmatpush.bf16.msra.mxu0 %v329
    %341 = vmatmul.bf16.gmra.mxu0 %v331
    %v342 = vpop.f32.mrf.mxu0
    %v343 = vadd.f32 0.0, %v342
    %v344 = vpop.f32.mrf.mxu0
    %v345 = vadd.f32 0.0, %v344
    %346 = vdwg.mxu0
    %v347 = vrcp.pop %v324
    %v348 = vrcp.pop %v327
    %v349 = vmul.f32 %v343, %v347
    %v350 = vmul.f32 %v345, %v348
    %v351 = vld [vmem:[%s10] sm:$0x1]
    %v353 = vperm.slane %v351, 0
    %v355 = vadd.f32 %v349, %v353
    %v356 = vadd.f32 %v350, %v353
    %v357 = vmax.f32 %v355, 0.0
    %v358 = vmax.f32 %v356, 0.0
    %v359 = vld [vmem:[#allocation2] sm:$0xff]
    %v360 = vld [vmem:[#allocation2 + $0x8] sm:$0xff]
    %v361 = vld [vmem:[#allocation2 + $0x10] sm:$0xff]
    %v362 = vld [vmem:[#allocation2 + $0x18] sm:$0xff]
    %v363 = vld [vmem:[#allocation2 + $0x20] sm:$0xff]
    %v364 = vld [vmem:[#allocation2 + $0x28] sm:$0xff]
    %v365 = vld [vmem:[#allocation2 + $0x30] sm:$0xff]
    %v366 = vld [vmem:[#allocation2 + $0x38] sm:$0xff]
    %v367 = vld [vmem:[#allocation2 + $0x40] sm:$0xff]
    %v368 = vld [vmem:[#allocation2 + $0x48] sm:$0xff]
    %v369 = vld [vmem:[#allocation2 + $0x50] sm:$0xff]
    %v370 = vld [vmem:[#allocation2 + $0x58] sm:$0xff]
    %v371 = vld [vmem:[#allocation2 + $0x60] sm:$0xff]
    %v372 = vld [vmem:[#allocation2 + $0x68] sm:$0xff]
    %v373 = vld [vmem:[#allocation2 + $0x70] sm:$0xff]
    %v374 = vld [vmem:[#allocation2 + $0x78] sm:$0xff]
    %v375 = vpack.c.bf16 %v358, %v357
    %v376 = vpack.c.bf16 %v360, %v359
    %v377 = vpack.c.bf16 %v362, %v361
    %v378 = vpack.c.bf16 %v364, %v363
    %v379 = vpack.c.bf16 %v366, %v365
    %v380 = vpack.c.bf16 %v368, %v367
    %v381 = vpack.c.bf16 %v370, %v369
    %v382 = vpack.c.bf16 %v372, %v371
    %v383 = vpack.c.bf16 %v374, %v373
    %384 = vmatpush.bf16.msra.mxu0 %v383
    %385 = vmatpush.bf16.msra.mxu0 %v382
    %386 = vmatpush.bf16.msra.mxu0 %v381
    %387 = vmatpush.bf16.msra.mxu0 %v380
    %388 = vmatpush.bf16.msra.mxu0 %v379
    %389 = vmatpush.bf16.msra.mxu0 %v378
    %390 = vmatpush.bf16.msra.mxu0 %v377
    %391 = vmatpush.bf16.msra.mxu0 %v376
    %392 = vmatmul.bf16.gmra.mxu0 %v375
    %v393 = vpop.f32.mrf.mxu0
    %v394 = vadd.f32 0.0, %v393
    %v395 = vpop.f32.mrf.mxu0
    %v396 = vadd.f32 0.0, %v395
    %397 = vdwg.mxu0
    %v398 = vld [vmem:[%s13] sm:$0x1]
    %v400 = vperm.slane %v398, 0
    %v402 = vmul.f32 %v394, %v400
    %v403 = vmul.f32 %v396, %v400
    %404 = vadd.xlane.f32.xlu0 %v402
    %v405 = vpop.xlane.xlu0 %404
    %406 = vadd.xlane.f32.xlu0 %v403
    %v407 = vpop.xlane.xlu0 %406
    %v408 = vld [vmem:[%s12] sm:$0x1]
    %409 = vmatpush.xpose.msra.mxu0 0.0
    %410 = vmatpush.xpose.msra.mxu0 0.0
    %411 = vmatpush.xpose.msra.mxu0 0.0
    %412 = vmatpush.xpose.msra.mxu0 0.0
    %413 = vmatpush.xpose.msra.mxu0 0.0
    %414 = vmatpush.xpose.msra.mxu0 0.0
    %415 = vmatpush.xpose.msra.mxu0 0.0
    %416 = vmatpush.xpose.msra.mxu0 0.0
    %417 = vmatpush.xpose.msra.mxu0 0.0
    %418 = vmatpush.xpose.msra.mxu0 0.0
    %419 = vmatpush.xpose.msra.mxu0 0.0
    %420 = vmatpush.xpose.msra.mxu0 0.0
    %421 = vmatpush.xpose.msra.mxu0 0.0
    %422 = vmatpush.xpose.msra.mxu0 0.0
    %423 = vmatpush.xpose.msra.mxu0 %v396
    %424 = vmatpush.xpose.msra.mxu0 %v394
    %425 = vmatmul.f32.gmra.mxu0 %v408
    %v426 = vpop.f32.mrf.mxu0
    %v427 = vadd.f32 0.0, %v426
    %428 = vdwg.mxu0
    %v429 = vperm.slane %v427, 0
    %v430 = vadd.f32 %v405, %v429
    %v431 = vadd.f32 %v407, %v429
    %v432 = vmul.f32 %v430, 0.2
    %v433 = vmul.f32 %v431, 0.2
    %v434 = vmax.f32 %v430, %v432
    %v435 = vmax.f32 %v431, %v433
    %v436 = vsel %vm177, %v434, -1e+30
    %v437 = vsel %vm178, %v435, -1e+30
    %v438 = vsel %vm181, %v436, -inf
    %439 = vmax.xlane.f32.xlu0 %v438
    %v440 = vpop.xlane.xlu0 %439
    %v441 = vsel %vm181, %v437, -inf
    %442 = vmax.xlane.f32.xlu0 %v441
    %v443 = vpop.xlane.xlu0 %442
    %v444 = vsub.f32 %v436, %v440
    %v445 = vsub.f32 %v437, %v443
    %v446 = vmul.f32 %v444, 1.442695
    %v447 = vpow.pop %v446
    %v448 = vmul.f32 %v445, 1.442695
    %v449 = vpow.pop %v448
    %v450 = vsel %vm181, %v447, 0.0
    %451 = vadd.xlane.f32.xlu0 %v450
    %v452 = vpop.xlane.xlu0 %451
    %v453 = vsel %vm181, %v449, 0.0
    %454 = vadd.xlane.f32.xlu0 %v453
    %v455 = vpop.xlane.xlu0 %454
    %v456 = vpack.c.bf16 %v449, %v447
    %v457 = vpack.c.bf16 %v396, %v394
    %v459 = vsel %vm181, %v456, 0
    %461 = vmatpush.bf16.msra.mxu0 0
    %462 = vmatpush.bf16.msra.mxu0 0
    %463 = vmatpush.bf16.msra.mxu0 0
    %464 = vmatpush.bf16.msra.mxu0 0
    %465 = vmatpush.bf16.msra.mxu0 0
    %466 = vmatpush.bf16.msra.mxu0 0
    %467 = vmatpush.bf16.msra.mxu0 0
    %468 = vmatpush.bf16.msra.mxu0 %v457
    %469 = vmatmul.bf16.gmra.mxu0 %v459
    %v470 = vpop.f32.mrf.mxu0
    %v471 = vadd.f32 0.0, %v470
    %v472 = vpop.f32.mrf.mxu0
    %v473 = vadd.f32 0.0, %v472
    %474 = vdwg.mxu0
    %v475 = vrcp.pop %v452
    %v476 = vrcp.pop %v455
    %v477 = vmul.f32 %v471, %v475
    %v478 = vmul.f32 %v473, %v476
    %v479 = vld [vmem:[%s14] sm:$0x1]
    %v481 = vperm.slane %v479, 0
    %v483 = vadd.f32 %v477, %v481
    %v484 = vadd.f32 %v478, %v481
    %v485 = vmax.f32 %v483, 0.0
    %v486 = vmax.f32 %v484, 0.0
    %v487 = vlaneseq
    %v488 = vshrl.u32 %v487, 7
    %v489 = vld [vmem:[%s2] sm:$0x1]
    %v490 = vperm.slane %v489, 0
    %vm491 = vcmp.eq.s32.totalorder %v488, %v490
    %v492 = vsel %vm491, 1, 0
    %v493 = vcvt.s32.f32 %v492
    %v494 = vpack.c.bf16 %v493, %v493
    %v495 = vpack.c.bf16 %v486, %v485
    %v497 = vsel %vm181, %v494, 0
    %499 = vmatpush.bf16.msra.mxu0 0
    %500 = vmatpush.bf16.msra.mxu0 0
    %501 = vmatpush.bf16.msra.mxu0 0
    %502 = vmatpush.bf16.msra.mxu0 0
    %503 = vmatpush.bf16.msra.mxu0 0
    %504 = vmatpush.bf16.msra.mxu0 0
    %505 = vmatpush.bf16.msra.mxu0 0
    %506 = vmatpush.bf16.msra.mxu0 %v495
    %507 = vmatmul.bf16.gmra.mxu0 %v497
    %v508 = vpop.f32.mrf.mxu0
    %v509 = vadd.f32 0.0, %v508
    %v510 = vpop.f32.mrf.mxu0
    %511 = vdwg.mxu0
    %v512 = vpack.c.bf16 %v509, %v509
    %v513 = vld [vmem:[%s15] sm:$0xff]
    %v514 = vld [vmem:[%s15 + $0x8] sm:$0xff]
    %v515 = vld [vmem:[%s15 + $0x10] sm:$0xff]
    %v516 = vld [vmem:[%s15 + $0x18] sm:$0xff]
    %v517 = vld [vmem:[%s15 + $0x20] sm:$0xff]
    %v518 = vld [vmem:[%s15 + $0x28] sm:$0xff]
    %v519 = vld [vmem:[%s15 + $0x30] sm:$0xff]
    %v520 = vld [vmem:[%s15 + $0x38] sm:$0xff]
    %v521 = vld [vmem:[%s15 + $0x40] sm:$0xff]
    %v522 = vld [vmem:[%s15 + $0x48] sm:$0xff]
    %v523 = vld [vmem:[%s15 + $0x50] sm:$0xff]
    %v524 = vld [vmem:[%s15 + $0x58] sm:$0xff]
    %v525 = vld [vmem:[%s15 + $0x60] sm:$0xff]
    %v526 = vld [vmem:[%s15 + $0x68] sm:$0xff]
    %v527 = vld [vmem:[%s15 + $0x70] sm:$0xff]
    %v528 = vld [vmem:[%s15 + $0x78] sm:$0xff]
    %v529 = vpack.c.bf16 %v514, %v513
    %v530 = vpack.c.bf16 %v516, %v515
    %v531 = vpack.c.bf16 %v518, %v517
    %v532 = vpack.c.bf16 %v520, %v519
    %v533 = vpack.c.bf16 %v522, %v521
    %v534 = vpack.c.bf16 %v524, %v523
    %v535 = vpack.c.bf16 %v526, %v525
    %v536 = vpack.c.bf16 %v528, %v527
    %v537 = vld [vmem:[%s16] sm:$0x1]
    %v539 = vperm.slane %v537, 0
    %541 = vmatpush.bf16.msra.mxu0 %v536
    %542 = vmatpush.bf16.msra.mxu0 %v535
    %543 = vmatpush.bf16.msra.mxu0 %v534
    %544 = vmatpush.bf16.msra.mxu0 %v533
    %545 = vmatpush.bf16.msra.mxu0 %v532
    %546 = vmatpush.bf16.msra.mxu0 %v531
    %547 = vmatpush.bf16.msra.mxu0 %v530
    %548 = vmatpush.bf16.msra.mxu0 %v529
    %549 = vmatmul.bf16.gmra.mxu0 %v512
    %v550 = vpop.f32.mrf.mxu0
    %v551 = vadd.f32 %v539, %v550
    %v552 = vpop.f32.mrf.mxu0
    %553 = vdwg.mxu0
    %vm554 = vcmask 58368
    %555 = vst.msk [vmem:[#allocation5] sm:$0x3] %vm554, %v551
    // Predicated region
    $region74: #{tpu_custom_call.1} parent=1 // pred_check
      _
    $region75: #{tpu_custom_call.1} parent=1 // pred_check_branch
      %557 = sbr.rel (0) target = $region77
    $region76: #{tpu_custom_call.1} parent=1 // pred_region
      %559 = vsyncadd [#allocation4], 0
      %s561 = sshll.u32 [#allocation5], 4
      %s562 = int_to_ptr.vmem [resolvable:$true] %s561
      %s563 = sshll.u32 %s17, 4
      %s564 = int_to_ptr.hbm [resolvable:$true] %s563
      %566 = dma.vmem_to_hbm [thread:$0]  %s562, 32, %s564, [#allocation4]
    $region77: #{tpu_custom_call.1} parent=1 // pred_fallthru
      _
    // Predicated region
    $region78: #{tpu_custom_call.1} parent=1 // pred_check
      _
    $region79: #{tpu_custom_call.1} parent=1 // pred_check_branch
      %568 = sbr.rel (0) target = $region81
    $region80: #{tpu_custom_call.1} parent=1 // pred_region
      %570 = dma.done [#allocation4], 32
    $region81: #{tpu_custom_call.1} parent=1 // pred_fallthru
      _
    %571 = vsyncpa [#allocation3], 1
    %572 = vsyncpa [#allocation4], 1

</llo_original>
